<compile_context>
chip_gen: v6e
topology: v6e:2x2x1
jax: 0.10.0
libtpu: 0.0.40
codegen_flags: <defaults>
</compile_context>

<pallas_src>
import functools

import jax
import jax.numpy as jnp
from jax.experimental import pallas as pl
from jax.experimental.pallas import tpu as pltpu


# ----------------------------- Pallas kernel -----------------------------

def _residual_block_kernel(*refs, kernel_size, dilation, has_resample, tile_t, halo):
    if has_resample:
        wr_ref, br_ref, wc_ref, bc_ref, x_ref, o_ref, carry_ref = refs
    else:
        wc_ref, bc_ref, x_ref, o_ref, carry_ref = refs

    cdt = wc_ref.dtype                      # bf16 matmul operands (f32 MXU accumulate)
    x = x_ref[0]                            # (Cin, tile_t): channels->sublanes, time->lanes

    # ---- optional fused weight-normed 1x1 resample conv ----
    if has_resample:
        xr = jnp.dot(wr_ref[...], x.astype(cdt),
                     preferred_element_type=jnp.float32) + br_ref[...]
    else:
        xr = x.astype(jnp.float32)
    cout = xr.shape[0]

    # ---- causal history: (K-1)*dilation columns carried across time tiles ----
    if halo > 0:
        @pl.when(pl.program_id(1) == 0)
        def _():                                        # ConstantPad1d left zero pad
            carry_ref[...] = jnp.zeros_like(carry_ref)
        full = jnp.concatenate([carry_ref[...], xr], axis=-1)   # (Cout, halo + tile_t)
        carry_ref[...] = full[:, tile_t:]                        # history for next tile
    else:
        full = xr

    # ---- weight-normed dilated causal conv: K accumulating MXU dots on shifted slices ----
    acc = jnp.zeros((cout, tile_t), jnp.float32)
    for k in range(kernel_size):
        tap = full[:, k * dilation:k * dilation + tile_t].astype(cdt)
        acc = acc + jnp.dot(wc_ref[k], tap, preferred_element_type=jnp.float32)

    # TODO(synk): nn.Dropout(0.2) has no deterministic forward; eval-mode identity here.
    y = jnp.maximum(acc + bc_ref[...], 0.0)                     # activation (ReLU)
    o_ref[0] = jnp.maximum(xr + y, 0.0).astype(o_ref.dtype)     # residual + ReLU


# ----------------------------- wrapper / params -----------------------------

def _round_up(n, m):
    return (n + m - 1) // m * m


def weight_norm(v, g):
    # PyTorch nn.utils.weight_norm (dim=0): per-output-channel direction * gain.
    norm = jnp.sqrt(jnp.sum(v * v, axis=tuple(range(1, v.ndim)), keepdims=True))
    return g * v / norm


def prepare_residual_block(params, kernel_size, compute_dtype=jnp.bfloat16):
    """Fold weight_norm + weight layout + matmul-dtype cast once (static at inference)."""
    prep = {"kernel_size": kernel_size}
    if "resample_v" in params:
        wr = weight_norm(params["resample_v"], params["resample_g"])[:, :, 0]   # (Cout, Cin)
        prep["wr"] = wr.astype(compute_dtype)
        prep["br"] = params["resample_b"].reshape(-1, 1).astype(jnp.float32)
    wc = weight_norm(params["conv_v"], params["conv_g"])                        # (Cout, Cout, K)
    prep["wc"] = jnp.transpose(wc, (2, 0, 1)).astype(compute_dtype)             # (K, Cout, Cout)
    prep["bc"] = params["conv_b"].reshape(-1, 1).astype(jnp.float32)
    return prep


def residual_block(prep, x, *, dilation, tile_t=512, out_dtype=None):
    """Fused ResidualBlock forward. x: (B, C_in, T) in the PyTorch NCT layout."""
    B, cin, T = x.shape
    K = prep["kernel_size"]
    has_resample = "wr" in prep
    cout = prep["wc"].shape[1]
    halo = (K - 1) * dilation
    out_dtype = x.dtype if out_dtype is None else out_dtype

    # lane-dense time tiles: multiple of 128, no bigger than the (rounded) sequence
    tile_t = max(128, min(_round_up(tile_t, 128), _round_up(T, 128)))
    t_pad = _round_up(T, tile_t)
    xp = x if t_pad == T else jnp.pad(x, ((0, 0), (0, 0), (0, t_pad - T)))
    n_t = t_pad // tile_t

    args, in_specs = [], []
    if has_resample:
        args += [prep["wr"], prep["br"]]
        in_specs += [pl.BlockSpec(prep["wr"].shape, lambda b, j: (0, 0)),
                     pl.BlockSpec(prep["br"].shape, lambda b, j: (0, 0))]
    args += [prep["wc"], prep["bc"], xp]
    in_specs += [pl.BlockSpec(prep["wc"].shape, lambda b, j: (0, 0, 0)),
                 pl.BlockSpec(prep["bc"].shape, lambda b, j: (0, 0)),
                 pl.BlockSpec((1, cin, tile_t), lambda b, j: (b, 0, j))]

    weight_bytes = sum(int(a.size) * a.dtype.itemsize for a in args[:-1])
    flops = 2 * B * t_pad * K * cout * cout
    if has_resample:
        flops += 2 * B * t_pad * cin * cout
    bytes_accessed = (int(xp.size) * xp.dtype.itemsize
                      + B * cout * t_pad * jnp.dtype(out_dtype).itemsize
                      + weight_bytes)

    # VMEM budget: double-buffered in/out tiles + in-register work + weights, 2x headroom.
    need = (2 * 2 * (cin + cout) * tile_t * 4
            + 6 * cout * tile_t * 4
            + cout * max(halo, 1) * 4
            + weight_bytes)
    vmem_limit = int(min(64 * 2 ** 20, max(16 * 2 ** 20, 2 * need)))

    kernel = functools.partial(_residual_block_kernel, kernel_size=K, dilation=dilation,
                               has_resample=has_resample, tile_t=tile_t, halo=halo)
    out = pl.pallas_call(
        kernel,
        out_shape=jax.ShapeDtypeStruct((B, cout, t_pad), out_dtype),
        grid=(B, n_t),                        # batch: parallel; time: sequential (carry)
        in_specs=in_specs,
        out_specs=pl.BlockSpec((1, cout, tile_t), lambda b, j: (b, 0, j)),
        scratch_shapes=[pltpu.VMEM((cout, max(halo, 1)), jnp.float32)],
        compiler_params=pltpu.CompilerParams(
            dimension_semantics=("parallel", "arbitrary"),
            vmem_limit_bytes=vmem_limit),
        cost_estimate=pl.CostEstimate(flops=flops, transcendentals=0,
                                      bytes_accessed=bytes_accessed),
    )(*args)
    return out if t_pad == T else out[:, :, :T]


# ----------------------------- pure-JAX reference -----------------------------

def residual_block_ref(params, x, *, kernel_size, dilation, compute_dtype=jnp.bfloat16):
    """Reference at matched matmul precision (bf16 operands, f32 accumulate)."""
    def mm(w, a):
        return jnp.einsum("oc,bct->bot", w.astype(compute_dtype), a.astype(compute_dtype),
                          preferred_element_type=jnp.float32)

    if "resample_v" in params:
        wr = weight_norm(params["resample_v"], params["resample_g"])[:, :, 0]
        x = mm(wr, x) + params["resample_b"].reshape(1, -1, 1)
    wc = weight_norm(params["conv_v"], params["conv_g"])
    T = x.shape[-1]
    xpad = jnp.pad(x, ((0, 0), (0, 0), ((kernel_size - 1) * dilation, 0)))
    y = params["conv_b"].reshape(1, -1, 1).astype(jnp.float32)
    for k in range(kernel_size):
        y = y + mm(wc[:, :, k], xpad[:, :, k * dilation:k * dilation + T])
    y = jnp.maximum(y, 0.0)
    return jnp.maximum(x + y, 0.0)


def init_residual_block(key, in_channels, out_channels, kernel_size):
    kr, kc, kb = jax.random.split(key, 3)
    p = {}
    if in_channels != out_channels:
        p["resample_v"] = 0.01 * jax.random.normal(kr, (out_channels, in_channels, 1), jnp.float32)
        p["resample_g"] = jnp.ones((out_channels, 1, 1), jnp.float32)
        p["resample_b"] = jnp.zeros((out_channels,), jnp.float32)
    p["conv_v"] = 0.01 * jax.random.normal(kc, (out_channels, out_channels, kernel_size), jnp.float32)
    p["conv_g"] = jnp.ones((out_channels, 1, 1), jnp.float32)
    p["conv_b"] = 0.1 * jax.random.normal(kb, (out_channels,), jnp.float32)
    return p


# ----------------------------- demo -----------------------------

if __name__ == "__main__":
    key = jax.random.PRNGKey(0)
    k_x, k_p1, k_p2 = jax.random.split(key, 3)

    B, Cin, Cout, T, K = 2, 4, 16, 200, 2
    x = jax.random.normal(k_x, (B, Cin, T), jnp.float32)

    # two stacked blocks as used in an STCN TCN: 4->16 (resample, dilation 1) then
    # 16->16 (no resample, dilation 2) — exercises both kernel code paths.
    raw1 = init_residual_block(k_p1, Cin, Cout, K)
    raw2 = init_residual_block(k_p2, Cout, Cout, K)
    p1 = prepare_residual_block(raw1, K)
    p2 = prepare_residual_block(raw2, K)

    # small tile so the demo also exercises multi-tile time iteration + the causal carry
    fwd = jax.jit(lambda a: residual_block(
        p2, residual_block(p1, a, dilation=1, tile_t=128), dilation=2, tile_t=128))
    out = jax.block_until_ready(fwd(x))

    ref = residual_block_ref(raw2,
                             residual_block_ref(raw1, x, kernel_size=K, dilation=1),
                             kernel_size=K, dilation=2)
    err = float(jnp.max(jnp.abs(out - ref)))

    assert out.shape == (B, Cout, T), out.shape
    assert bool(jnp.all(jnp.isfinite(out)))
    assert err < 5e-2, f"max abs err vs reference: {err}"
    print("KERNEL_OK")
</pallas_src>

<mosaic_0001>
module attributes {stable_mosaic.version = 11 : i64} {
  func.func @_residual_block_kernel(%arg0: i32, %arg1: i32, %arg2: memref<16x4xbf16, #tpu.memory_space<vmem>>, %arg3: memref<16x1xf32, #tpu.memory_space<vmem>>, %arg4: memref<2x16x16xbf16, #tpu.memory_space<vmem>>, %arg5: memref<16x1xf32, #tpu.memory_space<vmem>>, %arg6: memref<1x4x128xf32, #tpu.memory_space<vmem>>, %arg7: memref<1x16x128xf32, #tpu.memory_space<vmem>>, %arg8: memref<16x1xf32, #tpu.memory_space<vmem>>) attributes {dimension_semantics = [#tpu.dimension_semantics<parallel>, #tpu.dimension_semantics<arbitrary>], iteration_bounds = array<i64: 2, 2>, scalar_prefetch = 0 : i64, scratch_operands = 1 : i64, tpu.core_type = #tpu.core_type<tc>, window_params = [{pipeline_mode = #tpu.pipeline_mode<synchronous>, transform_indices = @transform_0, window_bounds = array<i64: 16, 4>}, {pipeline_mode = #tpu.pipeline_mode<synchronous>, transform_indices = @transform_1, window_bounds = array<i64: 16, 1>}, {pipeline_mode = #tpu.pipeline_mode<synchronous>, transform_indices = @transform_2, window_bounds = array<i64: 2, 16, 16>}, {pipeline_mode = #tpu.pipeline_mode<synchronous>, transform_indices = @transform_3, window_bounds = array<i64: 16, 1>}, {transform_indices = @transform_4, window_bounds = array<i64: 1, 4, 128>}, {transform_indices = @transform_5, window_bounds = array<i64: 1, 16, 128>}]} {
    %c0 = arith.constant 0 : index
    %c0_0 = arith.constant 0 : index
    %c0_1 = arith.constant 0 : index
    %0 = vector.load %arg6[%c0, %c0_0, %c0_1] : memref<1x4x128xf32, #tpu.memory_space<vmem>>, vector<1x4x128xf32>
    %1 = vector.shape_cast %0 : vector<1x4x128xf32> to vector<4x128xf32>
    %c0_2 = arith.constant 0 : index
    %c0_3 = arith.constant 0 : index
    %2 = vector.load %arg2[%c0_2, %c0_3] : memref<16x4xbf16, #tpu.memory_space<vmem>>, vector<16x4xbf16>
    %3 = arith.truncf %1 : vector<4x128xf32> to vector<4x128xbf16>
    %cst = arith.constant dense<0.000000e+00> : vector<16x128xf32>
    %4 = tpu.matmul %2, %3, %cst {dimension_numbers = #tpu.dot_dimension_numbers<[1], [0], [0], [1], [0, 0, 1, 1], [], []>} : vector<16x4xbf16>, vector<4x128xbf16>, vector<16x128xf32> -> vector<16x128xf32>
    %c0_4 = arith.constant 0 : index
    %c0_5 = arith.constant 0 : index
    %5 = vector.load %arg3[%c0_4, %c0_5] : memref<16x1xf32, #tpu.memory_space<vmem>>, vector<16x1xf32>
    %6 = vector.broadcast %5 : vector<16x1xf32> to vector<16x128xf32>
    %7 = arith.addf %4, %6 : vector<16x128xf32>
    %c0_i32 = arith.constant 0 : i32
    %8 = arith.cmpi eq, %arg1, %c0_i32 : i32
    %9 = arith.extui %8 : i1 to i32
    %c0_i32_6 = arith.constant 0 : i32
    %10 = arith.cmpi ne, %9, %c0_i32_6 : i32
    scf.if %10 {
      %cst_26 = arith.constant 0.000000e+00 : f32
      %39 = vector.broadcast %cst_26 : f32 to vector<16x1xf32>
      %c0_27 = arith.constant 0 : index
      %c0_28 = arith.constant 0 : index
      %40 = vector.load %arg8[%c0_27, %c0_28] : memref<16x1xf32, #tpu.memory_space<vmem>>, vector<16x1xf32>
      tpu.vector_store %arg8[%c0_27, %c0_28], %39 {strides = array<i32>} : memref<16x1xf32, #tpu.memory_space<vmem>>, vector<16x1xf32>,
    } else {
    }
    %c0_7 = arith.constant 0 : index
    %c0_8 = arith.constant 0 : index
    %11 = vector.load %arg8[%c0_7, %c0_8] : memref<16x1xf32, #tpu.memory_space<vmem>>, vector<16x1xf32>
    %12 = tpu.concatenate %11, %7 in 1 : vector<16x1xf32>, vector<16x128xf32> -> vector<16x129xf32>
    %13 = vector.extract_strided_slice %12 {offsets = [0, 128], sizes = [16, 1], strides = [1, 1]} : vector<16x129xf32> to vector<16x1xf32>
    %c0_9 = arith.constant 0 : index
    %c0_10 = arith.constant 0 : index
    %14 = vector.load %arg8[%c0_9, %c0_10] : memref<16x1xf32, #tpu.memory_space<vmem>>, vector<16x1xf32>
    tpu.vector_store %arg8[%c0_9, %c0_10], %13 {strides = array<i32>} : memref<16x1xf32, #tpu.memory_space<vmem>>, vector<16x1xf32>,
    %cst_11 = arith.constant 0.000000e+00 : f32
    %15 = vector.broadcast %cst_11 : f32 to vector<16x128xf32>
    %16 = vector.extract_strided_slice %12 {offsets = [0, 0], sizes = [16, 128], strides = [1, 1]} : vector<16x129xf32> to vector<16x128xf32>
    %17 = arith.truncf %16 : vector<16x128xf32> to vector<16x128xbf16>
    %c0_12 = arith.constant 0 : index
    %c0_13 = arith.constant 0 : index
    %c0_14 = arith.constant 0 : index
    %18 = vector.load %arg4[%c0_12, %c0_13, %c0_14] : memref<2x16x16xbf16, #tpu.memory_space<vmem>>, vector<1x16x16xbf16>
    %19 = vector.shape_cast %18 : vector<1x16x16xbf16> to vector<16x16xbf16>
    %cst_15 = arith.constant dense<0.000000e+00> : vector<16x128xf32>
    %20 = tpu.matmul %19, %17, %cst_15 {dimension_numbers = #tpu.dot_dimension_numbers<[1], [0], [0], [1], [0, 0, 1, 1], [], []>} : vector<16x16xbf16>, vector<16x128xbf16>, vector<16x128xf32> -> vector<16x128xf32>
    %21 = arith.addf %15, %20 : vector<16x128xf32>
    %22 = vector.extract_strided_slice %12 {offsets = [0, 1], sizes = [16, 128], strides = [1, 1]} : vector<16x129xf32> to vector<16x128xf32>
    %23 = arith.truncf %22 : vector<16x128xf32> to vector<16x128xbf16>
    %c1 = arith.constant 1 : index
    %c0_16 = arith.constant 0 : index
    %c0_17 = arith.constant 0 : index
    %24 = vector.load %arg4[%c1, %c0_16, %c0_17] : memref<2x16x16xbf16, #tpu.memory_space<vmem>>, vector<1x16x16xbf16>
    %25 = vector.shape_cast %24 : vector<1x16x16xbf16> to vector<16x16xbf16>
    %cst_18 = arith.constant dense<0.000000e+00> : vector<16x128xf32>
    %26 = tpu.matmul %25, %23, %cst_18 {dimension_numbers = #tpu.dot_dimension_numbers<[1], [0], [0], [1], [0, 0, 1, 1], [], []>} : vector<16x16xbf16>, vector<16x128xbf16>, vector<16x128xf32> -> vector<16x128xf32>
    %27 = arith.addf %21, %26 : vector<16x128xf32>
    %c0_19 = arith.constant 0 : index
    %c0_20 = arith.constant 0 : index
    %28 = vector.load %arg5[%c0_19, %c0_20] : memref<16x1xf32, #tpu.memory_space<vmem>>, vector<16x1xf32>
    %29 = vector.broadcast %28 : vector<16x1xf32> to vector<16x128xf32>
    %30 = arith.addf %27, %29 : vector<16x128xf32>
    %cst_21 = arith.constant 0.000000e+00 : f32
    %31 = vector.broadcast %cst_21 : f32 to vector<16x128xf32>
    %32 = arith.maximumf %30, %31 : vector<16x128xf32>
    %33 = arith.addf %7, %32 : vector<16x128xf32>
    %cst_22 = arith.constant 0.000000e+00 : f32
    %34 = vector.broadcast %cst_22 : f32 to vector<16x128xf32>
    %35 = arith.maximumf %33, %34 : vector<16x128xf32>
    %c0_23 = arith.constant 0 : index
    %c0_24 = arith.constant 0 : index
    %c0_25 = arith.constant 0 : index
    %36 = vector.load %arg7[%c0_23, %c0_24, %c0_25] : memref<1x16x128xf32, #tpu.memory_space<vmem>>, vector<1x16x128xf32>
    %37 = vector.shape_cast %36 : vector<1x16x128xf32> to vector<16x128xf32>
    %38 = vector.shape_cast %35 : vector<16x128xf32> to vector<1x16x128xf32>
    tpu.vector_store %arg7[%c0_23, %c0_24, %c0_25], %38 {strides = array<i32>} : memref<1x16x128xf32, #tpu.memory_space<vmem>>, vector<1x16x128xf32>,
    return
  }
  func.func @transform_0(%arg0: i32, %arg1: i32) -> (i32, i32) {
    %c0_i32 = arith.constant 0 : i32
    %c0_i32_0 = arith.constant 0 : i32
    %c0_i32_1 = arith.constant 0 : i32
    return %c0_i32, %c0_i32_0 : i32, i32
  }
  func.func @transform_1(%arg0: i32, %arg1: i32) -> (i32, i32) {
    %c0_i32 = arith.constant 0 : i32
    %c0_i32_0 = arith.constant 0 : i32
    %c0_i32_1 = arith.constant 0 : i32
    return %c0_i32, %c0_i32_0 : i32, i32
  }
  func.func @transform_2(%arg0: i32, %arg1: i32) -> (i32, i32, i32) {
    %c0_i32 = arith.constant 0 : i32
    %c0_i32_0 = arith.constant 0 : i32
    %c0_i32_1 = arith.constant 0 : i32
    %c0_i32_2 = arith.constant 0 : i32
    return %c0_i32, %c0_i32_0, %c0_i32_1 : i32, i32, i32
  }
  func.func @transform_3(%arg0: i32, %arg1: i32) -> (i32, i32) {
    %c0_i32 = arith.constant 0 : i32
    %c0_i32_0 = arith.constant 0 : i32
    %c0_i32_1 = arith.constant 0 : i32
    return %c0_i32, %c0_i32_0 : i32, i32
  }
  func.func @transform_4(%arg0: i32, %arg1: i32) -> (i32, i32, i32) {
    %c0_i32 = arith.constant 0 : i32
    %c0_i32_0 = arith.constant 0 : i32
    return %arg0, %c0_i32, %arg1 : i32, i32, i32
  }
  func.func @transform_5(%arg0: i32, %arg1: i32) -> (i32, i32, i32) {
    %c0_i32 = arith.constant 0 : i32
    %c0_i32_0 = arith.constant 0 : i32
    return %arg0, %c0_i32, %arg1 : i32, i32, i32
  }
}

module attributes {stable_mosaic.version = 11 : i64} {
  func.func @_residual_block_kernel(%arg0: i32, %arg1: i32, %arg2: memref<2x16x16xbf16, #tpu.memory_space<vmem>>, %arg3: memref<16x1xf32, #tpu.memory_space<vmem>>, %arg4: memref<1x16x128xf32, #tpu.memory_space<vmem>>, %arg5: memref<1x16x128xf32, #tpu.memory_space<vmem>>, %arg6: memref<16x2xf32, #tpu.memory_space<vmem>>) attributes {dimension_semantics = [#tpu.dimension_semantics<parallel>, #tpu.dimension_semantics<arbitrary>], iteration_bounds = array<i64: 2, 2>, scalar_prefetch = 0 : i64, scratch_operands = 1 : i64, tpu.core_type = #tpu.core_type<tc>, window_params = [{pipeline_mode = #tpu.pipeline_mode<synchronous>, transform_indices = @transform_0, window_bounds = array<i64: 2, 16, 16>}, {pipeline_mode = #tpu.pipeline_mode<synchronous>, transform_indices = @transform_1, window_bounds = array<i64: 16, 1>}, {transform_indices = @transform_2, window_bounds = array<i64: 1, 16, 128>}, {transform_indices = @transform_3, window_bounds = array<i64: 1, 16, 128>}]} {
    %c0 = arith.constant 0 : index
    %c0_0 = arith.constant 0 : index
    %c0_1 = arith.constant 0 : index
    %0 = vector.load %arg4[%c0, %c0_0, %c0_1] : memref<1x16x128xf32, #tpu.memory_space<vmem>>, vector<1x16x128xf32>
    %1 = vector.shape_cast %0 : vector<1x16x128xf32> to vector<16x128xf32>
    %c0_i32 = arith.constant 0 : i32
    %2 = arith.cmpi eq, %arg1, %c0_i32 : i32
    %3 = arith.extui %2 : i1 to i32
    %c0_i32_2 = arith.constant 0 : i32
    %4 = arith.cmpi ne, %3, %c0_i32_2 : i32
    scf.if %4 {
      %cst_21 = arith.constant 0.000000e+00 : f32
      %33 = vector.broadcast %cst_21 : f32 to vector<16x2xf32>
      %c0_22 = arith.constant 0 : index
      %c0_23 = arith.constant 0 : index
      %34 = vector.load %arg6[%c0_22, %c0_23] : memref<16x2xf32, #tpu.memory_space<vmem>>, vector<16x2xf32>
      tpu.vector_store %arg6[%c0_22, %c0_23], %33 {strides = array<i32>} : memref<16x2xf32, #tpu.memory_space<vmem>>, vector<16x2xf32>,
    } else {
    }
    %c0_3 = arith.constant 0 : index
    %c0_4 = arith.constant 0 : index
    %5 = vector.load %arg6[%c0_3, %c0_4] : memref<16x2xf32, #tpu.memory_space<vmem>>, vector<16x2xf32>
    %6 = tpu.concatenate %5, %1 in 1 : vector<16x2xf32>, vector<16x128xf32> -> vector<16x130xf32>
    %7 = vector.extract_strided_slice %6 {offsets = [0, 128], sizes = [16, 2], strides = [1, 1]} : vector<16x130xf32> to vector<16x2xf32>
    %c0_5 = arith.constant 0 : index
    %c0_6 = arith.constant 0 : index
    %8 = vector.load %arg6[%c0_5, %c0_6] : memref<16x2xf32, #tpu.memory_space<vmem>>, vector<16x2xf32>
    tpu.vector_store %arg6[%c0_5, %c0_6], %7 {strides = array<i32>} : memref<16x2xf32, #tpu.memory_space<vmem>>, vector<16x2xf32>,
    %cst = arith.constant 0.000000e+00 : f32
    %9 = vector.broadcast %cst : f32 to vector<16x128xf32>
    %10 = vector.extract_strided_slice %6 {offsets = [0, 0], sizes = [16, 128], strides = [1, 1]} : vector<16x130xf32> to vector<16x128xf32>
    %11 = arith.truncf %10 : vector<16x128xf32> to vector<16x128xbf16>
    %c0_7 = arith.constant 0 : index
    %c0_8 = arith.constant 0 : index
    %c0_9 = arith.constant 0 : index
    %12 = vector.load %arg2[%c0_7, %c0_8, %c0_9] : memref<2x16x16xbf16, #tpu.memory_space<vmem>>, vector<1x16x16xbf16>
    %13 = vector.shape_cast %12 : vector<1x16x16xbf16> to vector<16x16xbf16>
    %cst_10 = arith.constant dense<0.000000e+00> : vector<16x128xf32>
    %14 = tpu.matmul %13, %11, %cst_10 {dimension_numbers = #tpu.dot_dimension_numbers<[1], [0], [0], [1], [0, 0, 1, 1], [], []>} : vector<16x16xbf16>, vector<16x128xbf16>, vector<16x128xf32> -> vector<16x128xf32>
    %15 = arith.addf %9, %14 : vector<16x128xf32>
    %16 = vector.extract_strided_slice %6 {offsets = [0, 2], sizes = [16, 128], strides = [1, 1]} : vector<16x130xf32> to vector<16x128xf32>
    %17 = arith.truncf %16 : vector<16x128xf32> to vector<16x128xbf16>
    %c1 = arith.constant 1 : index
    %c0_11 = arith.constant 0 : index
    %c0_12 = arith.constant 0 : index
    %18 = vector.load %arg2[%c1, %c0_11, %c0_12] : memref<2x16x16xbf16, #tpu.memory_space<vmem>>, vector<1x16x16xbf16>
    %19 = vector.shape_cast %18 : vector<1x16x16xbf16> to vector<16x16xbf16>
    %cst_13 = arith.constant dense<0.000000e+00> : vector<16x128xf32>
    %20 = tpu.matmul %19, %17, %cst_13 {dimension_numbers = #tpu.dot_dimension_numbers<[1], [0], [0], [1], [0, 0, 1, 1], [], []>} : vector<16x16xbf16>, vector<16x128xbf16>, vector<16x128xf32> -> vector<16x128xf32>
    %21 = arith.addf %15, %20 : vector<16x128xf32>
    %c0_14 = arith.constant 0 : index
    %c0_15 = arith.constant 0 : index
    %22 = vector.load %arg3[%c0_14, %c0_15] : memref<16x1xf32, #tpu.memory_space<vmem>>, vector<16x1xf32>
    %23 = vector.broadcast %22 : vector<16x1xf32> to vector<16x128xf32>
    %24 = arith.addf %21, %23 : vector<16x128xf32>
    %cst_16 = arith.constant 0.000000e+00 : f32
    %25 = vector.broadcast %cst_16 : f32 to vector<16x128xf32>
    %26 = arith.maximumf %24, %25 : vector<16x128xf32>
    %27 = arith.addf %1, %26 : vector<16x128xf32>
    %cst_17 = arith.constant 0.000000e+00 : f32
    %28 = vector.broadcast %cst_17 : f32 to vector<16x128xf32>
    %29 = arith.maximumf %27, %28 : vector<16x128xf32>
    %c0_18 = arith.constant 0 : index
    %c0_19 = arith.constant 0 : index
    %c0_20 = arith.constant 0 : index
    %30 = vector.load %arg5[%c0_18, %c0_19, %c0_20] : memref<1x16x128xf32, #tpu.memory_space<vmem>>, vector<1x16x128xf32>
    %31 = vector.shape_cast %30 : vector<1x16x128xf32> to vector<16x128xf32>
    %32 = vector.shape_cast %29 : vector<16x128xf32> to vector<1x16x128xf32>
    tpu.vector_store %arg5[%c0_18, %c0_19, %c0_20], %32 {strides = array<i32>} : memref<1x16x128xf32, #tpu.memory_space<vmem>>, vector<1x16x128xf32>,
    return
  }
  func.func @transform_0(%arg0: i32, %arg1: i32) -> (i32, i32, i32) {
    %c0_i32 = arith.constant 0 : i32
    %c0_i32_0 = arith.constant 0 : i32
    %c0_i32_1 = arith.constant 0 : i32
    %c0_i32_2 = arith.constant 0 : i32
    return %c0_i32, %c0_i32_0, %c0_i32_1 : i32, i32, i32
  }
  func.func @transform_1(%arg0: i32, %arg1: i32) -> (i32, i32) {
    %c0_i32 = arith.constant 0 : i32
    %c0_i32_0 = arith.constant 0 : i32
    %c0_i32_1 = arith.constant 0 : i32
    return %c0_i32, %c0_i32_0 : i32, i32
  }
  func.func @transform_2(%arg0: i32, %arg1: i32) -> (i32, i32, i32) {
    %c0_i32 = arith.constant 0 : i32
    %c0_i32_0 = arith.constant 0 : i32
    return %arg0, %c0_i32, %arg1 : i32, i32, i32
  }
  func.func @transform_3(%arg0: i32, %arg1: i32) -> (i32, i32, i32) {
    %c0_i32 = arith.constant 0 : i32
    %c0_i32_0 = arith.constant 0 : i32
    return %arg0, %c0_i32, %arg1 : i32, i32, i32
  }
}

</mosaic_0001>

<llo_original>
// kernel: _lambda_.2
$region0: #{_lambda_.2}
  #allocation0 [shape = 'u32[]', space=smem, size = 0x4, offset = 0x4, fixed_abs, tag = 'smem constant byte address 0x4 - core index']
  #allocation1 [shape = 'u32[144,128]{1,0:T(1,128)}', space=vmem, size = 0x12000, scoped, tag = 'internal scratch']
  #allocation2 [shape = 'f32[16,1]{1,0:T(8,128)}', space=vmem, size = 0x2000, scoped, tag = 'scratch operand']
  %s0 = inlined_call_operand.vmem [shape: bf16[16,4], index: 0, kind: input, shape index: {}]
  %s1 = inlined_call_operand.vmem [shape: f32[16,1], index: 1, kind: input, shape index: {}]
  %s2 = inlined_call_operand.vmem [shape: bf16[2,16,16], index: 2, kind: input, shape index: {}]
  %s3 = inlined_call_operand.vmem [shape: f32[16,1], index: 3, kind: input, shape index: {}]
  %s4 = inlined_call_operand.vmem [shape: f32[2,4,256], index: 4, kind: input, shape index: {}]
  %s5 = inlined_call_operand.vmem [shape: f32[2,16,256], index: 5, kind: output, shape index: {}]
  %s6 = sld [smem:[#allocation0]]
  $region91: #{_lambda_.2} parent=0
    _
  %s8 = ssub.s32 1, %s6
  %s9 = scalar_select 0, %s8, %s6
  $region1: #{_lambda_.2} parent=0
    #allocation3 [shape = 'u8[16384]{0}', space=vmem, size = 0x4000, scoped, tag = 'output window, operand 0']
    loop: start=0, step=1, limit=6
    $region2: #{_lambda_.2} parent=1 // loop_pre_header
      _
    $region3: #{_lambda_.2} parent=1 // loop_header
      %s11 = sphi 0, %s15
      %p12 = scmp.ge.s32.totalorder %s11, 6
      %s18 = sphi 0, %s30
      %s19 = sphi 0, %s26
      %s20 = sphi 0, %s18
      %s21 = sphi 0, %s19
      %s22 = sphi 0, %s20
      %s23 = sphi 0, %s21
      %s31 = sphi 0, %s31
      %s33 = sphi 0, %s31
      %s34 = sphi 0, %s33
      %s48 = sphi 0, %s34
      %s52 = sphi 0, %s52
      %s54 = sphi 0, %s52
      %s55 = sphi 0, %s54
      %s69 = sphi 0, %s55
      %s73 = sphi 0, %s73
      %s75 = sphi 0, %s73
      %s76 = sphi 0, %s75
      %s90 = sphi 0, %s76
      %s94 = sphi 0, %s94
      %s96 = sphi 0, %s94
      %s97 = sphi 0, %s96
      %s111 = sphi 0, %s97
      %s119 = sphi 0, %s121
      %s122 = sphi 0, %s119
      %s123 = sphi 0, %s122
      %s139 = sphi 0, %s123
      %s147 = sphi 0, %s149
      %s150 = sphi 0, %s147
      %s151 = sphi 0, %s150
      %s167 = sphi 0, %s151
    $region4: #{_lambda_.2} parent=1 // loop_header_branch
      %14 = sbr.rel (%p12) target = $region8
    $region5: #{_lambda_.2} parent=1 // loop_body
      %s16 = ssub.s32 %s11, 1
      %s17 = ssub.s32 %s11, 2
      %s24 = sadd.s32 1, %s19
      %p25 = scmp.ge.s32.totalorder %s24, 2
      %s26 = scalar_select %p25, 0, %s24
      %s27 = sadd.s32 1, %s18
      %s28 = scalar_select %p25, %s27, %s18
      %p29 = scmp.ge.s32.totalorder %s28, 2
      %s30 = scalar_select %p29, 0, %s28
      %s32 = sadd.s32 %s31, 1
      %p35 = scmp.eq.s32.totalorder %s11, 3
      %p36 = scmp.ne.s32.totalorder %s31, %s33
      %p37 = scmp.eq.s32.totalorder %s11, 0
      %p38 = por %p36, %p37
      %p39 = scmp.ne.s32.totalorder %s31, %s33
      %p40 = scmp.eq.s32.totalorder %s16, 3
      %p41 = por %p39, %p40
      %p42 = scmp.ne.s32.totalorder %s33, %s34
      %p43 = scmp.eq.s32.totalorder %s16, 0
      %p44 = por %p42, %p43
      %p45 = scmp.ne.s32.totalorder %s33, %s34
      %p46 = scmp.eq.s32.totalorder %s17, 3
      %p47 = por %p45, %p46
      %p49 = scmp.ne.s32.totalorder %s34, %s48
      %p50 = scmp.eq.s32.totalorder %s17, 0
      %p51 = por %p49, %p50
      %s53 = sadd.s32 %s52, 1
      %p56 = scmp.eq.s32.totalorder %s11, 3
      %p57 = scmp.ne.s32.totalorder %s52, %s54
      %p58 = scmp.eq.s32.totalorder %s11, 0
      %p59 = por %p57, %p58
      %p60 = scmp.ne.s32.totalorder %s52, %s54
      %p61 = scmp.eq.s32.totalorder %s16, 3
      %p62 = por %p60, %p61
      %p63 = scmp.ne.s32.totalorder %s54, %s55
      %p64 = scmp.eq.s32.totalorder %s16, 0
      %p65 = por %p63, %p64
      %p66 = scmp.ne.s32.totalorder %s54, %s55
      %p67 = scmp.eq.s32.totalorder %s17, 3
      %p68 = por %p66, %p67
      %p70 = scmp.ne.s32.totalorder %s55, %s69
      %p71 = scmp.eq.s32.totalorder %s17, 0
      %p72 = por %p70, %p71
      %s74 = sadd.s32 %s73, 1
      %p77 = scmp.eq.s32.totalorder %s11, 3
      %p78 = scmp.ne.s32.totalorder %s73, %s75
      %p79 = scmp.eq.s32.totalorder %s11, 0
      %p80 = por %p78, %p79
      %p81 = scmp.ne.s32.totalorder %s73, %s75
      %p82 = scmp.eq.s32.totalorder %s16, 3
      %p83 = por %p81, %p82
      %p84 = scmp.ne.s32.totalorder %s75, %s76
      %p85 = scmp.eq.s32.totalorder %s16, 0
      %p86 = por %p84, %p85
      %p87 = scmp.ne.s32.totalorder %s75, %s76
      %p88 = scmp.eq.s32.totalorder %s17, 3
      %p89 = por %p87, %p88
      %p91 = scmp.ne.s32.totalorder %s76, %s90
      %p92 = scmp.eq.s32.totalorder %s17, 0
      %p93 = por %p91, %p92
      %s95 = sadd.s32 %s94, 1
      %p98 = scmp.eq.s32.totalorder %s11, 3
      %p99 = scmp.ne.s32.totalorder %s94, %s96
      %p100 = scmp.eq.s32.totalorder %s11, 0
      %p101 = por %p99, %p100
      %p102 = scmp.ne.s32.totalorder %s94, %s96
      %p103 = scmp.eq.s32.totalorder %s16, 3
      %p104 = por %p102, %p103
      %p105 = scmp.ne.s32.totalorder %s96, %s97
      %p106 = scmp.eq.s32.totalorder %s16, 0
      %p107 = por %p105, %p106
      %p108 = scmp.ne.s32.totalorder %s96, %s97
      %p109 = scmp.eq.s32.totalorder %s17, 3
      %p110 = por %p108, %p109
      %p112 = scmp.ne.s32.totalorder %s97, %s111
      %p113 = scmp.eq.s32.totalorder %s17, 0
      %p114 = por %p112, %p113
      %s115 = ssub.s32 %s18, %s30
      %s116 = ssub.s32 %s19, %s26
      %s117 = sor.u32 %s115, %s116
      %p118 = scmp.eq.s32.totalorder %s117, 0
      %s120 = sadd.s32 %s119, 1
      %s121 = scalar_select %p118, %s119, %s120
      %p124 = pneg %p118
      %p125 = scmp.eq.s32.totalorder %s11, 3
      %p126 = por %p124, %p125
      %p127 = scmp.ne.s32.totalorder %s119, %s122
      %p128 = scmp.eq.s32.totalorder %s11, 0
      %p129 = por %p127, %p128
      %p130 = scmp.ne.s32.totalorder %s119, %s122
      %p131 = scmp.eq.s32.totalorder %s16, 3
      %p132 = por %p130, %p131
      %p133 = scmp.ne.s32.totalorder %s122, %s123
      %p134 = scmp.eq.s32.totalorder %s16, 0
      %p135 = por %p133, %p134
      %p136 = scmp.ne.s32.totalorder %s122, %s123
      %p137 = scmp.eq.s32.totalorder %s17, 3
      %p138 = por %p136, %p137
      %p140 = scmp.ne.s32.totalorder %s123, %s139
      %p141 = scmp.eq.s32.totalorder %s17, 0
      %p142 = por %p140, %p141
      %s143 = ssub.s32 %s18, %s30
      %s144 = ssub.s32 %s19, %s26
      %s145 = sor.u32 %s143, %s144
      %p146 = scmp.eq.s32.totalorder %s145, 0
      %s148 = sadd.s32 %s147, 1
      %s149 = scalar_select %p146, %s147, %s148
      %p152 = pneg %p146
      %p153 = scmp.eq.s32.totalorder %s11, 3
      %p154 = por %p152, %p153
      %p155 = scmp.ne.s32.totalorder %s147, %s150
      %p156 = scmp.eq.s32.totalorder %s11, 0
      %p157 = por %p155, %p156
      %p158 = scmp.ne.s32.totalorder %s147, %s150
      %p159 = scmp.eq.s32.totalorder %s16, 3
      %p160 = por %p158, %p159
      %p161 = scmp.ne.s32.totalorder %s150, %s151
      %p162 = scmp.eq.s32.totalorder %s16, 0
      %p163 = por %p161, %p162
      %p164 = scmp.ne.s32.totalorder %s150, %s151
      %p165 = scmp.eq.s32.totalorder %s17, 3
      %p166 = por %p164, %p165
      %p168 = scmp.ne.s32.totalorder %s151, %s167
      %p169 = scmp.eq.s32.totalorder %s17, 0
      %p170 = por %p168, %p169
      %p171 = scmp.le.s32.totalorder 1, %s11
      %p172 = scmp.lt.s32.totalorder %s11, 5
      %p173 = pnand %p171, %p172
      %p174 = pneg %p173
      // Predicated region
      $region9: #{_lambda_.2} parent=5 // pred_check
        _
      $region10: #{_lambda_.2} parent=5 // pred_check_branch
        %176 = sbr.rel (%p173) target = $region12
      $region11: #{_lambda_.2} parent=5 // pred_region
        %s177 = ssub.s32 %s11, 1
        // Predicated region
        $region13: #{_lambda_.2} parent=11 // pred_check
          %p178 = pneg %p44
        $region14: #{_lambda_.2} parent=11 // pred_check_branch
          %180 = sbr.rel (%p178) target = $region16
        $region15: #{_lambda_.2} parent=11 // pred_region
          _
        $region16: #{_lambda_.2} parent=11 // pred_fallthru
          _
        // Predicated region
        $region17: #{_lambda_.2} parent=11 // pred_check
          %p181 = pneg %p65
        $region18: #{_lambda_.2} parent=11 // pred_check_branch
          %183 = sbr.rel (%p181) target = $region20
        $region19: #{_lambda_.2} parent=11 // pred_region
          _
        $region20: #{_lambda_.2} parent=11 // pred_fallthru
          _
        // Predicated region
        $region21: #{_lambda_.2} parent=11 // pred_check
          %p184 = pneg %p86
        $region22: #{_lambda_.2} parent=11 // pred_check_branch
          %186 = sbr.rel (%p184) target = $region24
        $region23: #{_lambda_.2} parent=11 // pred_region
          _
        $region24: #{_lambda_.2} parent=11 // pred_fallthru
          _
        // Predicated region
        $region25: #{_lambda_.2} parent=11 // pred_check
          %p187 = pneg %p107
        $region26: #{_lambda_.2} parent=11 // pred_check_branch
          %189 = sbr.rel (%p187) target = $region28
        $region27: #{_lambda_.2} parent=11 // pred_region
          _
        $region28: #{_lambda_.2} parent=11 // pred_fallthru
          _
      $region12: #{_lambda_.2} parent=5 // pred_fallthru
        _
      %p190 = scmp.lt.s32.totalorder %s11, 4
      // Predicated region
      $region29: #{_lambda_.2} parent=5 // pred_check
        %p191 = pneg %p190
      $region30: #{_lambda_.2} parent=5 // pred_check_branch
        %193 = sbr.rel (%p191) target = $region32
      $region31: #{_lambda_.2} parent=5 // pred_region
        // Predicated region
        $region33: #{_lambda_.2} parent=31 // pred_check
          %p194 = pneg %p129
        $region34: #{_lambda_.2} parent=31 // pred_check_branch
          %196 = sbr.rel (%p194) target = $region36
        $region35: #{_lambda_.2} parent=31 // pred_region
          %p197 = scmp.lt.s32.totalorder %s18, 1
          %s198 = scalar_select %p197, %s18, 1
          %p199 = scmp.lt.s32.totalorder %s19, 1
          %s200 = scalar_select %p199, %s19, 1
          %s201 = smul.addr %s198, 2
          %s202 = sadd.s32 %s200, %s201
          %s203 = smul.addr %s202, 4
          %s204 = scalar_lea.vmem %s4, %s203
        $region36: #{_lambda_.2} parent=31 // pred_fallthru
          _
      $region32: #{_lambda_.2} parent=5 // pred_fallthru
        _
      %p205 = scmp.le.s32.totalorder 1, %s11
      %p206 = scmp.lt.s32.totalorder %s11, 5
      %p207 = pnand %p205, %p206
      %p208 = pneg %p207
      // Predicated region
      $region37: #{_lambda_.2} parent=5 // pred_check
        _
      $region38: #{_lambda_.2} parent=5 // pred_check_branch
        %210 = sbr.rel (%p207) target = $region40
      $region39: #{_lambda_.2} parent=5 // pred_region
        %s211 = ssub.s32 %s11, 1
        %p212 = pneg %p44
        %p213 = pneg %p41
        %p214 = pneg %p65
        %p215 = pneg %p62
        %p216 = pneg %p86
        %p217 = pneg %p83
        %p218 = pneg %p107
        %p219 = pneg %p104
        %p220 = scmp.lt.s32.totalorder %s20, 1
        %s221 = scalar_select %p220, %s20, 1
        %p222 = scmp.lt.s32.totalorder %s21, 1
        %s223 = scalar_select %p222, %s21, 1
        %s224 = smul.addr %s221, 2
        %s225 = sadd.s32 %s223, %s224
        %s226 = smul.addr %s225, 4
        %s227 = scalar_lea.vmem %s4, %s226
        %p228 = pneg %p135
        %p229 = pneg %p132
        %p230 = pneg %p163
        %p231 = pneg %p160
        %s232 = sand.u32 %s150, 1
        %s233 = sand.u32 %s150, 1
        %s234 = smul.addr %s233, 16
        %s235 = scalar_lea.vmem [#allocation3], %s234
        %p236 = scmp.lt.s32.totalorder %s20, 1
        %s237 = scalar_select %p236, %s20, 1
        %p238 = scmp.lt.s32.totalorder %s21, 1
        %s239 = scalar_select %p238, %s21, 1
        %s240 = smul.addr %s237, 2
        %s241 = sadd.s32 %s239, %s240
        %s242 = smul.addr %s241, 4
        %s243 = scalar_lea.vmem %s4, %s242
        %v245 = vld [vmem:[%s243] sm:$0xf]
        %v246 = vld [vmem:[%s0] sm:$0xf]
        %v247 = vld [vmem:[%s0 + $0x4] sm:$0xf]
        %v248 = vpack.c.bf16 %v245, %v245
        %v249 = vld [vmem:[%s1] sm:$0xff]
        %v250 = vld [vmem:[%s1 + $0x8] sm:$0xff]
        %252 = vset.pattern.permute.xlu0 0
        %253 = vperm.xlu0 %252, %v249
        %v254 = vpop.permute.xlu0 %253
        %257 = vset.pattern.permute.xlu0 0
        %258 = vperm.xlu0 %257, %v250
        %v259 = vpop.permute.xlu0 %258
        %v263 = vunpack.c.l.b16 %v246
        %v264 = vunpack.c.l.b16 %v247
        %v265 = vpack.c.b16 %v264, %v263
        %vm266 = vcmask 31744
        %v268 = vsel %vm266, %v265, 0
        %vm270 = vcmask 1041408
        %v272 = vsel %vm270, %v248, 0
        %274 = vmatprep.subr.bf16.mxu0 0
        %275 = vmatpush1.bf16.msra.mxu0 0
        %276 = vmatprep.subr.bf16.mxu0 0
        %277 = vmatpush1.bf16.msra.mxu0 0
        %278 = vmatprep.subr.bf16.mxu0 0
        %279 = vmatpush1.bf16.msra.mxu0 0
        %280 = vmatprep.subr.bf16.mxu0 0
        %281 = vmatpush1.bf16.msra.mxu0 0
        %282 = vmatprep.subr.bf16.mxu0 0
        %283 = vmatpush1.bf16.msra.mxu0 0
        %284 = vmatprep.subr.bf16.mxu0 0
        %285 = vmatpush1.bf16.msra.mxu0 0
        %286 = vmatprep.subr.bf16.mxu0 0
        %287 = vmatpush1.bf16.msra.mxu0 0
        %288 = vmatprep.subr.bf16.mxu0 0
        %289 = vmatpush1.bf16.msra.mxu0 %v272
        %290 = vmatprep.subr.bf16.mxu0 0
        %291 = vmatpush2.bf16.msra.mxu0 0
        %292 = vmatprep.subr.bf16.mxu0 0
        %293 = vmatpush2.bf16.msra.mxu0 0
        %294 = vmatprep.subr.bf16.mxu0 0
        %295 = vmatpush2.bf16.msra.mxu0 0
        %296 = vmatprep.subr.bf16.mxu0 0
        %297 = vmatpush2.bf16.msra.mxu0 0
        %298 = vmatprep.subr.bf16.mxu0 0
        %299 = vmatpush2.bf16.msra.mxu0 0
        %300 = vmatprep.subr.bf16.mxu0 0
        %301 = vmatpush2.bf16.msra.mxu0 0
        %302 = vmatprep.subr.bf16.mxu0 0
        %303 = vmatpush2.bf16.msra.mxu0 0
        %304 = vmatprep.subr.bf16.mxu0 0
        %305 = vmatpush2.bf16.msra.mxu0 0
        %306 = vmatprep.mubr.bf16.mxu0 0
        %307 = vmatmul.mubr.bf16.gmra.mxu0 %v268
        %v308 = vpop.f32.mrf.mxu0
        %v309 = vadd.f32 %v254, %v308
        %v310 = vpop.f32.mrf.mxu0
        %v311 = vpop.f32.mrf.mxu0
        %v312 = vadd.f32 %v259, %v311
        %v313 = vpop.f32.mrf.mxu0
        %314 = vdwg.mxu0
        %p315 = scmp.eq.s32.totalorder %s21, 0
        // Predicated region
        $region41: #{_lambda_.2} parent=39 // pred_check
          %p316 = pneg %p315
        $region42: #{_lambda_.2} parent=39 // pred_check_branch
          %318 = sbr.rel (%p316) target = $region44
        $region43: #{_lambda_.2} parent=39 // pred_region
          %vm319 = vcmask 7168
          %320 = vst.msk [vmem:[#allocation2] sm:$0xff] %vm319, 0.0
          %321 = vst.msk [vmem:[#allocation2 + $0x8] sm:$0xff] %vm319, 0.0
        $region44: #{_lambda_.2} parent=39 // pred_fallthru
          _
        %v322 = vld [vmem:[#allocation2] sm:$0xff]
        %v323 = vld [vmem:[#allocation2 + $0x8] sm:$0xff]
        %326 = vrot.lane.b32.xlu0 %v309, 1
        %v327 = vpop.permute.xlu0 %326
        %328 = vrot.lane.b32.xlu0 %v312, 1
        %v329 = vpop.permute.xlu0 %328
        %vm332 = vcmask 7168
        %v333 = vsel %vm332, %v322, %v327
        %v334 = vsel %vm332, %v323, %v329
        %335 = vst.msk [vmem:[#allocation2] sm:$0xff] %vm332, %v327
        %336 = vst.msk [vmem:[#allocation2 + $0x8] sm:$0xff] %vm332, %v329
        %v337 = vpack.c.bf16 %v334, %v333
        %v338 = vld [vmem:[%s2] sm:$0xf]
        %v339 = vld [vmem:[%s2 + $0x4] sm:$0xf]
        %v340 = vpack.c.bf16 %v329, %v327
        %s341 = scalar_lea.vmem %s2, 8
        %v342 = vld [vmem:[%s341] sm:$0xf]
        %v343 = vld [vmem:[%s341 + $0x4] sm:$0xf]
        %v346 = vunpack.c.l.b16 %v342
        %v347 = vunpack.c.l.b16 %v343
        %v348 = vpack.c.b16 %v347, %v346
        %351 = vrot.lane.b32.xlu0 %v337, 127
        %v352 = vpop.permute.xlu0 %351
        %353 = vrot.lane.b32.xlu0 %v340, 127
        %v354 = vpop.permute.xlu0 %353
        %vm355 = vcmask 1039360
        %v356 = vsel %vm355, %v352, %v354
        %vm358 = vcmask 130048
        %v360 = vsel %vm358, %v348, 0
        %362 = vmatprep.subr.bf16.mxu0 0
        %363 = vmatpush1.bf16.msra.mxu0 0
        %364 = vmatprep.subr.bf16.mxu0 0
        %365 = vmatpush1.bf16.msra.mxu0 0
        %366 = vmatprep.subr.bf16.mxu0 0
        %367 = vmatpush1.bf16.msra.mxu0 0
        %368 = vmatprep.subr.bf16.mxu0 0
        %369 = vmatpush1.bf16.msra.mxu0 0
        %370 = vmatprep.subr.bf16.mxu0 0
        %371 = vmatpush1.bf16.msra.mxu0 0
        %372 = vmatprep.subr.bf16.mxu0 0
        %373 = vmatpush1.bf16.msra.mxu0 0
        %374 = vmatprep.subr.bf16.mxu0 0
        %375 = vmatpush1.bf16.msra.mxu0 0
        %376 = vmatprep.subr.bf16.mxu0 0
        %377 = vmatpush1.bf16.msra.mxu0 %v356
        %378 = vmatprep.subr.bf16.mxu0 0
        %379 = vmatpush2.bf16.msra.mxu0 0
        %380 = vmatprep.subr.bf16.mxu0 0
        %381 = vmatpush2.bf16.msra.mxu0 0
        %382 = vmatprep.subr.bf16.mxu0 0
        %383 = vmatpush2.bf16.msra.mxu0 0
        %384 = vmatprep.subr.bf16.mxu0 0
        %385 = vmatpush2.bf16.msra.mxu0 0
        %386 = vmatprep.subr.bf16.mxu0 0
        %387 = vmatpush2.bf16.msra.mxu0 0
        %388 = vmatprep.subr.bf16.mxu0 0
        %389 = vmatpush2.bf16.msra.mxu0 0
        %390 = vmatprep.subr.bf16.mxu0 0
        %391 = vmatpush2.bf16.msra.mxu0 0
        %392 = vmatprep.subr.bf16.mxu0 0
        %393 = vmatpush2.bf16.msra.mxu0 0
        %394 = vmatprep.mubr.bf16.mxu0 0
        %395 = vmatmul.mubr.bf16.gmra.mxu0 %v360
        %v396 = vpop.f32.mrf.mxu0
        %v397 = vadd.f32 0.0, %v396
        %v398 = vpop.f32.mrf.mxu0
        %v399 = vpop.f32.mrf.mxu0
        %v400 = vadd.f32 0.0, %v399
        %v401 = vpop.f32.mrf.mxu0
        %402 = vdwg.mxu0
        %v405 = vunpack.c.l.b16 %v338
        %v406 = vunpack.c.l.b16 %v339
        %v407 = vpack.c.b16 %v406, %v405
        %v409 = vsel %vm358, %v407, 0
        %411 = vmatprep.subr.bf16.mxu0 0
        %412 = vmatpush1.bf16.msra.mxu0 0
        %413 = vmatprep.subr.bf16.mxu0 0
        %414 = vmatpush1.bf16.msra.mxu0 0
        %415 = vmatprep.subr.bf16.mxu0 0
        %416 = vmatpush1.bf16.msra.mxu0 0
        %417 = vmatprep.subr.bf16.mxu0 0
        %418 = vmatpush1.bf16.msra.mxu0 0
        %419 = vmatprep.subr.bf16.mxu0 0
        %420 = vmatpush1.bf16.msra.mxu0 0
        %421 = vmatprep.subr.bf16.mxu0 0
        %422 = vmatpush1.bf16.msra.mxu0 0
        %423 = vmatprep.subr.bf16.mxu0 0
        %424 = vmatpush1.bf16.msra.mxu0 0
        %425 = vmatprep.subr.bf16.mxu0 0
        %426 = vmatpush1.bf16.msra.mxu0 %v337
        %427 = vmatprep.subr.bf16.mxu0 0
        %428 = vmatpush2.bf16.msra.mxu0 0
        %429 = vmatprep.subr.bf16.mxu0 0
        %430 = vmatpush2.bf16.msra.mxu0 0
        %431 = vmatprep.subr.bf16.mxu0 0
        %432 = vmatpush2.bf16.msra.mxu0 0
        %433 = vmatprep.subr.bf16.mxu0 0
        %434 = vmatpush2.bf16.msra.mxu0 0
        %435 = vmatprep.subr.bf16.mxu0 0
        %436 = vmatpush2.bf16.msra.mxu0 0
        %437 = vmatprep.subr.bf16.mxu0 0
        %438 = vmatpush2.bf16.msra.mxu0 0
        %439 = vmatprep.subr.bf16.mxu0 0
        %440 = vmatpush2.bf16.msra.mxu0 0
        %441 = vmatprep.subr.bf16.mxu0 0
        %442 = vmatpush2.bf16.msra.mxu0 0
        %443 = vmatprep.mubr.bf16.mxu0 0
        %444 = vmatmul.mubr.bf16.gmra.mxu0 %v409
        %v445 = vpop.f32.mrf.mxu0
        %v446 = vadd.f32 %v397, %v445
        %v447 = vpop.f32.mrf.mxu0
        %v448 = vpop.f32.mrf.mxu0
        %v449 = vadd.f32 %v400, %v448
        %v450 = vpop.f32.mrf.mxu0
        %451 = vdwg.mxu0
        %v452 = vld [vmem:[%s3] sm:$0xff]
        %v453 = vld [vmem:[%s3 + $0x8] sm:$0xff]
        %455 = vset.pattern.permute.xlu0 0
        %456 = vperm.xlu0 %455, %v452
        %v457 = vpop.permute.xlu0 %456
        %460 = vset.pattern.permute.xlu0 0
        %461 = vperm.xlu0 %460, %v453
        %v462 = vpop.permute.xlu0 %461
        %v464 = vadd.f32 %v446, %v457
        %v465 = vadd.f32 %v449, %v462
        %v466 = vmax.f32 %v464, 0.0
        %v467 = vmax.f32 %v465, 0.0
        %v468 = vadd.f32 %v309, %v466
        %v469 = vadd.f32 %v312, %v467
        %v470 = vmax.f32 %v468, 0.0
        %v471 = vmax.f32 %v469, 0.0
        %472 = vst [vmem:[%s235] sm:$0xff] %v470
        %473 = vst [vmem:[%s235 + $0x8] sm:$0xff] %v471
        %s474 = sand.u32 %s150, 1
        %s475 = sand.u32 %s150, 1
        %s476 = smul.addr %s475, 16
        %s477 = scalar_lea.vmem [#allocation3], %s476
        // Predicated region
        $region45: #{_lambda_.2} parent=39 // pred_check
          %p478 = pneg %p160
        $region46: #{_lambda_.2} parent=39 // pred_check_branch
          %480 = sbr.rel (%p478) target = $region48
        $region47: #{_lambda_.2} parent=39 // pred_region
          %s481 = smul.addr %s20, 4
          %s482 = sadd.s32 %s21, %s481
          %s483 = smul.addr %s482, 8
          %s484 = scalar_lea.vmem %s5, %s483
          // Predicated region
          $region49: #{_lambda_.2} parent=47 // pred_check
            _
          $region50: #{_lambda_.2} parent=47 // pred_check_branch
            %486 = sbr.rel (0) target = $region52
          $region51: #{_lambda_.2} parent=47 // pred_region
            // Predicated region
            $region53: #{_lambda_.2} parent=51 // pred_check
              _
            $region54: #{_lambda_.2} parent=51 // pred_check_branch
              %488 = sbr.rel (0) target = $region56
            $region55: #{_lambda_.2} parent=51 // pred_region
              // Predicated region
              $region68: #{_lambda_.2} parent=55 // pred_check
                _
              $region69: #{_lambda_.2} parent=55 // pred_check_branch
                %506 = sbr.rel (0) target = $region71
              $region70: #{_lambda_.2} parent=55 // pred_region
                loop: start=0, step=1, limit=1
                $region72: #{_lambda_.2} parent=70 // loop_pre_header
                  _
                $region73: #{_lambda_.2} parent=70 // loop_header
                  %s508 = sphi 0, %s512
                  %p509 = scmp.ge.s32.totalorder %s508, 1
                  %s513 = sphi %s477, %s477
                  %s514 = sphi %s484, %s484
                $region74: #{_lambda_.2} parent=70 // loop_header_branch
                  %511 = sbr.rel (%p509) target = $region78
                $region75: #{_lambda_.2} parent=70 // loop_body
                  %v515 = vld [vmem:[%s513] sm:$0xff]
                  %516 = vst [vmem:[%s514] sm:$0xff] %v515
                  %v517 = vld [vmem:[%s513 + $0x8] sm:$0xff]
                  %518 = vst [vmem:[%s514 + $0x10] sm:$0xff] %v517
                $region76: #{_lambda_.2} parent=70 // loop_footer
                  %s512 = sadd.s32 1, %s508
                $region77: #{_lambda_.2} parent=70 // loop_footer_branch
                  %507 = sbr.rel target = $region73
                $region78: #{_lambda_.2} parent=70 // loop_exit
                  _
              $region71: #{_lambda_.2} parent=55 // pred_fallthru
                _
              // Predicated region
              $region79: #{_lambda_.2} parent=55 // pred_check
                _
              $region80: #{_lambda_.2} parent=55 // pred_check_branch
                %520 = sbr.rel target = $region82
              $region81: #{_lambda_.2} parent=55 // pred_region
                _
              $region82: #{_lambda_.2} parent=55 // pred_fallthru
                _
            $region56: #{_lambda_.2} parent=51 // pred_fallthru
              _
            // Predicated region
            $region57: #{_lambda_.2} parent=51 // pred_check
              _
            $region58: #{_lambda_.2} parent=51 // pred_check_branch
              %490 = sbr.rel target = $region60
            $region59: #{_lambda_.2} parent=51 // pred_region
              %s492 = ssub.s32 256, 1
              loop: start=0, step=1, limit=1
              $region61: #{_lambda_.2} parent=59 // loop_pre_header
                _
              $region62: #{_lambda_.2} parent=59 // loop_header
                %s494 = sphi 0, %s498
                %p495 = scmp.ge.s32.totalorder %s494, 1
                %s499 = sphi %s477, %s477
                %s500 = sphi %s484, %s484
              $region63: #{_lambda_.2} parent=59 // loop_header_branch
                %497 = sbr.rel (%p495) target = $region67
              $region64: #{_lambda_.2} parent=59 // loop_body
                %v501 = vld [vmem:[%s499] sm:%s492]
                %502 = vst [vmem:[%s500] sm:%s492] %v501
                %v503 = vld [vmem:[%s499 + $0x8] sm:%s492]
                %504 = vst [vmem:[%s500 + $0x10] sm:%s492] %v503
              $region65: #{_lambda_.2} parent=59 // loop_footer
                %s498 = sadd.s32 1, %s494
              $region66: #{_lambda_.2} parent=59 // loop_footer_branch
                %493 = sbr.rel target = $region62
              $region67: #{_lambda_.2} parent=59 // loop_exit
                _
            $region60: #{_lambda_.2} parent=51 // pred_fallthru
              _
          $region52: #{_lambda_.2} parent=47 // pred_fallthru
            _
          %521 = vnop
        $region48: #{_lambda_.2} parent=39 // pred_fallthru
          _
      $region40: #{_lambda_.2} parent=5 // pred_fallthru
        _
      %p522 = scmp.le.s32.totalorder 2, %s11
      // Predicated region
      $region83: #{_lambda_.2} parent=5 // pred_check
        %p523 = pneg %p522
      $region84: #{_lambda_.2} parent=5 // pred_check_branch
        %525 = sbr.rel (%p523) target = $region86
      $region85: #{_lambda_.2} parent=5 // pred_region
        %s526 = ssub.s32 %s11, 2
        // Predicated region
        $region87: #{_lambda_.2} parent=85 // pred_check
          %p527 = pneg %p166
        $region88: #{_lambda_.2} parent=85 // pred_check_branch
          %529 = sbr.rel (%p527) target = $region90
        $region89: #{_lambda_.2} parent=85 // pred_region
          %s530 = sand.u32 %s151, 1
          %s531 = sand.u32 %s151, 1
          %s532 = smul.addr %s531, 16
          %s533 = scalar_lea.vmem [#allocation3], %s532
        $region90: #{_lambda_.2} parent=85 // pred_fallthru
          _
      $region86: #{_lambda_.2} parent=5 // pred_fallthru
        _
    $region6: #{_lambda_.2} parent=1 // loop_footer
      %s15 = sadd.s32 1, %s11
    $region7: #{_lambda_.2} parent=1 // loop_footer_branch
      %10 = sbr.rel target = $region3
    $region8: #{_lambda_.2} parent=1 // loop_exit
      _

// kernel: _lambda_.3
$region0: #{_lambda_.3}
  #allocation0 [shape = 'u32[]', space=smem, size = 0x4, offset = 0x4, fixed_abs, tag = 'smem constant byte address 0x4 - core index']
  #allocation1 [shape = 'u32[144,128]{1,0:T(1,128)}', space=vmem, size = 0x12000, scoped, tag = 'internal scratch']
  #allocation2 [shape = 'f32[16,2]{1,0:T(8,128)}', space=vmem, size = 0x2000, scoped, tag = 'scratch operand']
  %s0 = inlined_call_operand.vmem [shape: bf16[2,16,16], index: 0, kind: input, shape index: {}]
  %s1 = inlined_call_operand.vmem [shape: f32[16,1], index: 1, kind: input, shape index: {}]
  %s2 = inlined_call_operand.vmem [shape: f32[2,16,256], index: 2, kind: input, shape index: {}]
  %s3 = inlined_call_operand.hbm [shape: f32[2,16,256], index: 3, kind: output, shape index: {}]
  %s4 = sld [smem:[#allocation0]]
  $region87: #{_lambda_.3} parent=0
    _
  %s6 = ssub.s32 1, %s4
  %s7 = scalar_select 0, %s6, %s4
  $region1: #{_lambda_.3} parent=0
    #allocation3 [shape = 'u8[16384]{0}', space=vmem, size = 0x4000, scoped, tag = 'input window, operand 2']
    #allocation4 [shape = 'u8[16384]{0}', space=vmem, size = 0x4000, scoped, tag = 'output window, operand 0']
    #allocation5 [shape = 's32[2]{0}', space=sflag, size = 0x8, scoped, tag = 'scoped memory for _lambda_.3']
    %8 = vsyncpa [#allocation5], 0
    %s9 = scalar_lea.sflag [#allocation5], 1
    %10 = vsyncpa %s9, 0
    loop: start=0, step=1, limit=6
    $region2: #{_lambda_.3} parent=1 // loop_pre_header
      _
    $region3: #{_lambda_.3} parent=1 // loop_header
      %s12 = sphi 0, %s16
      %p13 = scmp.ge.s32.totalorder %s12, 6
      %s19 = sphi 0, %s31
      %s20 = sphi 0, %s27
      %s21 = sphi 0, %s19
      %s22 = sphi 0, %s20
      %s23 = sphi 0, %s21
      %s24 = sphi 0, %s22
      %s32 = sphi 0, %s32
      %s34 = sphi 0, %s32
      %s35 = sphi 0, %s34
      %s49 = sphi 0, %s35
      %s53 = sphi 0, %s53
      %s55 = sphi 0, %s53
      %s56 = sphi 0, %s55
      %s70 = sphi 0, %s56
      %s78 = sphi 0, %s80
      %s81 = sphi 0, %s78
      %s82 = sphi 0, %s81
      %s98 = sphi 0, %s82
      %s106 = sphi 0, %s108
      %s109 = sphi 0, %s106
      %s110 = sphi 0, %s109
      %s126 = sphi 0, %s110
    $region4: #{_lambda_.3} parent=1 // loop_header_branch
      %15 = sbr.rel (%p13) target = $region8
    $region5: #{_lambda_.3} parent=1 // loop_body
      %s17 = ssub.s32 %s12, 1
      %s18 = ssub.s32 %s12, 2
      %s25 = sadd.s32 1, %s20
      %p26 = scmp.ge.s32.totalorder %s25, 2
      %s27 = scalar_select %p26, 0, %s25
      %s28 = sadd.s32 1, %s19
      %s29 = scalar_select %p26, %s28, %s19
      %p30 = scmp.ge.s32.totalorder %s29, 2
      %s31 = scalar_select %p30, 0, %s29
      %s33 = sadd.s32 %s32, 1
      %p36 = scmp.eq.s32.totalorder %s12, 3
      %p37 = scmp.ne.s32.totalorder %s32, %s34
      %p38 = scmp.eq.s32.totalorder %s12, 0
      %p39 = por %p37, %p38
      %p40 = scmp.ne.s32.totalorder %s32, %s34
      %p41 = scmp.eq.s32.totalorder %s17, 3
      %p42 = por %p40, %p41
      %p43 = scmp.ne.s32.totalorder %s34, %s35
      %p44 = scmp.eq.s32.totalorder %s17, 0
      %p45 = por %p43, %p44
      %p46 = scmp.ne.s32.totalorder %s34, %s35
      %p47 = scmp.eq.s32.totalorder %s18, 3
      %p48 = por %p46, %p47
      %p50 = scmp.ne.s32.totalorder %s35, %s49
      %p51 = scmp.eq.s32.totalorder %s18, 0
      %p52 = por %p50, %p51
      %s54 = sadd.s32 %s53, 1
      %p57 = scmp.eq.s32.totalorder %s12, 3
      %p58 = scmp.ne.s32.totalorder %s53, %s55
      %p59 = scmp.eq.s32.totalorder %s12, 0
      %p60 = por %p58, %p59
      %p61 = scmp.ne.s32.totalorder %s53, %s55
      %p62 = scmp.eq.s32.totalorder %s17, 3
      %p63 = por %p61, %p62
      %p64 = scmp.ne.s32.totalorder %s55, %s56
      %p65 = scmp.eq.s32.totalorder %s17, 0
      %p66 = por %p64, %p65
      %p67 = scmp.ne.s32.totalorder %s55, %s56
      %p68 = scmp.eq.s32.totalorder %s18, 3
      %p69 = por %p67, %p68
      %p71 = scmp.ne.s32.totalorder %s56, %s70
      %p72 = scmp.eq.s32.totalorder %s18, 0
      %p73 = por %p71, %p72
      %s74 = ssub.s32 %s19, %s31
      %s75 = ssub.s32 %s20, %s27
      %s76 = sor.u32 %s74, %s75
      %p77 = scmp.eq.s32.totalorder %s76, 0
      %s79 = sadd.s32 %s78, 1
      %s80 = scalar_select %p77, %s78, %s79
      %p83 = pneg %p77
      %p84 = scmp.eq.s32.totalorder %s12, 3
      %p85 = por %p83, %p84
      %p86 = scmp.ne.s32.totalorder %s78, %s81
      %p87 = scmp.eq.s32.totalorder %s12, 0
      %p88 = por %p86, %p87
      %p89 = scmp.ne.s32.totalorder %s78, %s81
      %p90 = scmp.eq.s32.totalorder %s17, 3
      %p91 = por %p89, %p90
      %p92 = scmp.ne.s32.totalorder %s81, %s82
      %p93 = scmp.eq.s32.totalorder %s17, 0
      %p94 = por %p92, %p93
      %p95 = scmp.ne.s32.totalorder %s81, %s82
      %p96 = scmp.eq.s32.totalorder %s18, 3
      %p97 = por %p95, %p96
      %p99 = scmp.ne.s32.totalorder %s82, %s98
      %p100 = scmp.eq.s32.totalorder %s18, 0
      %p101 = por %p99, %p100
      %s102 = ssub.s32 %s19, %s31
      %s103 = ssub.s32 %s20, %s27
      %s104 = sor.u32 %s102, %s103
      %p105 = scmp.eq.s32.totalorder %s104, 0
      %s107 = sadd.s32 %s106, 1
      %s108 = scalar_select %p105, %s106, %s107
      %p111 = pneg %p105
      %p112 = scmp.eq.s32.totalorder %s12, 3
      %p113 = por %p111, %p112
      %p114 = scmp.ne.s32.totalorder %s106, %s109
      %p115 = scmp.eq.s32.totalorder %s12, 0
      %p116 = por %p114, %p115
      %p117 = scmp.ne.s32.totalorder %s106, %s109
      %p118 = scmp.eq.s32.totalorder %s17, 3
      %p119 = por %p117, %p118
      %p120 = scmp.ne.s32.totalorder %s109, %s110
      %p121 = scmp.eq.s32.totalorder %s17, 0
      %p122 = por %p120, %p121
      %p123 = scmp.ne.s32.totalorder %s109, %s110
      %p124 = scmp.eq.s32.totalorder %s18, 3
      %p125 = por %p123, %p124
      %p127 = scmp.ne.s32.totalorder %s110, %s126
      %p128 = scmp.eq.s32.totalorder %s18, 0
      %p129 = por %p127, %p128
      %p130 = scmp.le.s32.totalorder 1, %s12
      %p131 = scmp.lt.s32.totalorder %s12, 5
      %p132 = pnand %p130, %p131
      %p133 = pneg %p132
      // Predicated region
      $region9: #{_lambda_.3} parent=5 // pred_check
        _
      $region10: #{_lambda_.3} parent=5 // pred_check_branch
        %135 = sbr.rel (%p132) target = $region12
      $region11: #{_lambda_.3} parent=5 // pred_region
        %s136 = ssub.s32 %s12, 1
        // Predicated region
        $region13: #{_lambda_.3} parent=11 // pred_check
          %p137 = pneg %p45
        $region14: #{_lambda_.3} parent=11 // pred_check_branch
          %139 = sbr.rel (%p137) target = $region16
        $region15: #{_lambda_.3} parent=11 // pred_region
          _
        $region16: #{_lambda_.3} parent=11 // pred_fallthru
          _
        // Predicated region
        $region17: #{_lambda_.3} parent=11 // pred_check
          %p140 = pneg %p66
        $region18: #{_lambda_.3} parent=11 // pred_check_branch
          %142 = sbr.rel (%p140) target = $region20
        $region19: #{_lambda_.3} parent=11 // pred_region
          _
        $region20: #{_lambda_.3} parent=11 // pred_fallthru
          _
      $region12: #{_lambda_.3} parent=5 // pred_fallthru
        _
      %p143 = scmp.lt.s32.totalorder %s12, 4
      // Predicated region
      $region21: #{_lambda_.3} parent=5 // pred_check
        %p144 = pneg %p143
      $region22: #{_lambda_.3} parent=5 // pred_check_branch
        %146 = sbr.rel (%p144) target = $region24
      $region23: #{_lambda_.3} parent=5 // pred_region
        // Predicated region
        $region25: #{_lambda_.3} parent=23 // pred_check
          %p147 = pneg %p88
        $region26: #{_lambda_.3} parent=23 // pred_check_branch
          %149 = sbr.rel (%p147) target = $region28
        $region27: #{_lambda_.3} parent=23 // pred_region
          %s150 = sand.u32 %s78, 1
          %s151 = sand.u32 %s78, 1
          %s152 = smul.addr %s151, 16
          %s153 = scalar_lea.vmem [#allocation3], %s152
          %s154 = smul.addr %s19, 4
          %s155 = sadd.s32 %s20, %s154
          %s156 = smul.addr %s155, 8
          %s157 = scalar_lea.vmem %s2, %s156
          // Predicated region
          $region29: #{_lambda_.3} parent=27 // pred_check
            _
          $region30: #{_lambda_.3} parent=27 // pred_check_branch
            %159 = sbr.rel (0) target = $region32
          $region31: #{_lambda_.3} parent=27 // pred_region
            // Predicated region
            $region33: #{_lambda_.3} parent=31 // pred_check
              _
            $region34: #{_lambda_.3} parent=31 // pred_check_branch
              %161 = sbr.rel (0) target = $region36
            $region35: #{_lambda_.3} parent=31 // pred_region
              // Predicated region
              $region48: #{_lambda_.3} parent=35 // pred_check
                _
              $region49: #{_lambda_.3} parent=35 // pred_check_branch
                %179 = sbr.rel (0) target = $region51
              $region50: #{_lambda_.3} parent=35 // pred_region
                loop: start=0, step=1, limit=1
                $region52: #{_lambda_.3} parent=50 // loop_pre_header
                  _
                $region53: #{_lambda_.3} parent=50 // loop_header
                  %s181 = sphi 0, %s185
                  %p182 = scmp.ge.s32.totalorder %s181, 1
                  %s186 = sphi %s157, %s157
                  %s187 = sphi %s153, %s153
                $region54: #{_lambda_.3} parent=50 // loop_header_branch
                  %184 = sbr.rel (%p182) target = $region58
                $region55: #{_lambda_.3} parent=50 // loop_body
                  %v188 = vld [vmem:[%s186] sm:$0xff]
                  %189 = vst [vmem:[%s187] sm:$0xff] %v188
                  %v190 = vld [vmem:[%s186 + $0x10] sm:$0xff]
                  %191 = vst [vmem:[%s187 + $0x8] sm:$0xff] %v190
                $region56: #{_lambda_.3} parent=50 // loop_footer
                  %s185 = sadd.s32 1, %s181
                $region57: #{_lambda_.3} parent=50 // loop_footer_branch
                  %180 = sbr.rel target = $region53
                $region58: #{_lambda_.3} parent=50 // loop_exit
                  _
              $region51: #{_lambda_.3} parent=35 // pred_fallthru
                _
              // Predicated region
              $region59: #{_lambda_.3} parent=35 // pred_check
                _
              $region60: #{_lambda_.3} parent=35 // pred_check_branch
                %193 = sbr.rel target = $region62
              $region61: #{_lambda_.3} parent=35 // pred_region
                _
              $region62: #{_lambda_.3} parent=35 // pred_fallthru
                _
            $region36: #{_lambda_.3} parent=31 // pred_fallthru
              _
            // Predicated region
            $region37: #{_lambda_.3} parent=31 // pred_check
              _
            $region38: #{_lambda_.3} parent=31 // pred_check_branch
              %163 = sbr.rel target = $region40
            $region39: #{_lambda_.3} parent=31 // pred_region
              %s165 = ssub.s32 256, 1
              loop: start=0, step=1, limit=1
              $region41: #{_lambda_.3} parent=39 // loop_pre_header
                _
              $region42: #{_lambda_.3} parent=39 // loop_header
                %s167 = sphi 0, %s171
                %p168 = scmp.ge.s32.totalorder %s167, 1
                %s172 = sphi %s157, %s157
                %s173 = sphi %s153, %s153
              $region43: #{_lambda_.3} parent=39 // loop_header_branch
                %170 = sbr.rel (%p168) target = $region47
              $region44: #{_lambda_.3} parent=39 // loop_body
                %v174 = vld [vmem:[%s172] sm:%s165]
                %175 = vst [vmem:[%s173] sm:%s165] %v174
                %v176 = vld [vmem:[%s172 + $0x10] sm:%s165]
                %177 = vst [vmem:[%s173 + $0x8] sm:%s165] %v176
              $region45: #{_lambda_.3} parent=39 // loop_footer
                %s171 = sadd.s32 1, %s167
              $region46: #{_lambda_.3} parent=39 // loop_footer_branch
                %166 = sbr.rel target = $region42
              $region47: #{_lambda_.3} parent=39 // loop_exit
                _
            $region40: #{_lambda_.3} parent=31 // pred_fallthru
              _
          $region32: #{_lambda_.3} parent=27 // pred_fallthru
            _
          %194 = vnop
        $region28: #{_lambda_.3} parent=23 // pred_fallthru
          _
      $region24: #{_lambda_.3} parent=5 // pred_fallthru
        _
      %p195 = scmp.le.s32.totalorder 1, %s12
      %p196 = scmp.lt.s32.totalorder %s12, 5
      %p197 = pnand %p195, %p196
      %p198 = pneg %p197
      // Predicated region
      $region63: #{_lambda_.3} parent=5 // pred_check
        _
      $region64: #{_lambda_.3} parent=5 // pred_check_branch
        %200 = sbr.rel (%p197) target = $region66
      $region65: #{_lambda_.3} parent=5 // pred_region
        %s201 = ssub.s32 %s12, 1
        %s202 = sand.u32 %s81, 1
        %s203 = sand.u32 %s81, 1
        %s204 = smul.addr %s203, 16
        %s205 = scalar_lea.vmem [#allocation3], %s204
        // Predicated region
        $region67: #{_lambda_.3} parent=65 // pred_check
          %p206 = pneg %p94
        $region68: #{_lambda_.3} parent=65 // pred_check_branch
          %208 = sbr.rel (%p206) target = $region70
        $region69: #{_lambda_.3} parent=65 // pred_region
          _
        $region70: #{_lambda_.3} parent=65 // pred_fallthru
          _
        %p209 = pneg %p45
        %p210 = pneg %p42
        %p211 = pneg %p66
        %p212 = pneg %p63
        %s213 = sand.u32 %s81, 1
        %s214 = sand.u32 %s81, 1
        %s215 = smul.addr %s214, 16
        %s216 = scalar_lea.vmem [#allocation3], %s215
        %p217 = pneg %p94
        %p218 = pneg %p91
        %p219 = pneg %p122
        %p220 = pneg %p119
        %s221 = sand.u32 %s109, 1
        %s222 = scalar_lea.sflag [#allocation5], %s221
        %s223 = sand.u32 %s109, 1
        %s224 = smul.addr %s223, 16
        %s225 = scalar_lea.vmem [#allocation4], %s224
        %v227 = vld [vmem:[%s205] sm:$0xff]
        %v228 = vld [vmem:[%s205 + $0x8] sm:$0xff]
        %p229 = scmp.eq.s32.totalorder %s22, 0
        // Predicated region
        $region71: #{_lambda_.3} parent=65 // pred_check
          %p230 = pneg %p229
        $region72: #{_lambda_.3} parent=65 // pred_check_branch
          %232 = sbr.rel (%p230) target = $region74
        $region73: #{_lambda_.3} parent=65 // pred_region
          %vm233 = vcmask 15360
          %234 = vst.msk [vmem:[#allocation2] sm:$0xff] %vm233, 0.0
          %235 = vst.msk [vmem:[#allocation2 + $0x8] sm:$0xff] %vm233, 0.0
        $region74: #{_lambda_.3} parent=65 // pred_fallthru
          _
        %v236 = vld [vmem:[#allocation2] sm:$0xff]
        %v237 = vld [vmem:[#allocation2 + $0x8] sm:$0xff]
        %240 = vrot.lane.b32.xlu0 %v227, 2
        %v241 = vpop.permute.xlu0 %240
        %242 = vrot.lane.b32.xlu0 %v228, 2
        %v243 = vpop.permute.xlu0 %242
        %vm246 = vcmask 15360
        %v247 = vsel %vm246, %v236, %v241
        %v248 = vsel %vm246, %v237, %v243
        %249 = vst.msk [vmem:[#allocation2] sm:$0xff] %vm246, %v241
        %250 = vst.msk [vmem:[#allocation2 + $0x8] sm:$0xff] %vm246, %v243
        %v251 = vpack.c.bf16 %v248, %v247
        %v252 = vld [vmem:[%s0] sm:$0xf]
        %v253 = vld [vmem:[%s0 + $0x4] sm:$0xf]
        %v254 = vpack.c.bf16 %v243, %v241
        %s255 = scalar_lea.vmem %s0, 8
        %v256 = vld [vmem:[%s255] sm:$0xf]
        %v257 = vld [vmem:[%s255 + $0x4] sm:$0xf]
        %v260 = vunpack.c.l.b16 %v256
        %v261 = vunpack.c.l.b16 %v257
        %v262 = vpack.c.b16 %v261, %v260
        %265 = vrot.lane.b32.xlu0 %v251, 126
        %v266 = vpop.permute.xlu0 %265
        %267 = vrot.lane.b32.xlu0 %v254, 126
        %v268 = vpop.permute.xlu0 %267
        %vm269 = vcmask 1031168
        %v270 = vsel %vm269, %v266, %v268
        %vm272 = vcmask 130048
        %v274 = vsel %vm272, %v262, 0
        %276 = vmatprep.subr.bf16.mxu0 0
        %277 = vmatpush1.bf16.msra.mxu0 0
        %278 = vmatprep.subr.bf16.mxu0 0
        %279 = vmatpush1.bf16.msra.mxu0 0
        %280 = vmatprep.subr.bf16.mxu0 0
        %281 = vmatpush1.bf16.msra.mxu0 0
        %282 = vmatprep.subr.bf16.mxu0 0
        %283 = vmatpush1.bf16.msra.mxu0 0
        %284 = vmatprep.subr.bf16.mxu0 0
        %285 = vmatpush1.bf16.msra.mxu0 0
        %286 = vmatprep.subr.bf16.mxu0 0
        %287 = vmatpush1.bf16.msra.mxu0 0
        %288 = vmatprep.subr.bf16.mxu0 0
        %289 = vmatpush1.bf16.msra.mxu0 0
        %290 = vmatprep.subr.bf16.mxu0 0
        %291 = vmatpush1.bf16.msra.mxu0 %v270
        %292 = vmatprep.subr.bf16.mxu0 0
        %293 = vmatpush2.bf16.msra.mxu0 0
        %294 = vmatprep.subr.bf16.mxu0 0
        %295 = vmatpush2.bf16.msra.mxu0 0
        %296 = vmatprep.subr.bf16.mxu0 0
        %297 = vmatpush2.bf16.msra.mxu0 0
        %298 = vmatprep.subr.bf16.mxu0 0
        %299 = vmatpush2.bf16.msra.mxu0 0
        %300 = vmatprep.subr.bf16.mxu0 0
        %301 = vmatpush2.bf16.msra.mxu0 0
        %302 = vmatprep.subr.bf16.mxu0 0
        %303 = vmatpush2.bf16.msra.mxu0 0
        %304 = vmatprep.subr.bf16.mxu0 0
        %305 = vmatpush2.bf16.msra.mxu0 0
        %306 = vmatprep.subr.bf16.mxu0 0
        %307 = vmatpush2.bf16.msra.mxu0 0
        %308 = vmatprep.mubr.bf16.mxu0 0
        %309 = vmatmul.mubr.bf16.gmra.mxu0 %v274
        %v310 = vpop.f32.mrf.mxu0
        %v311 = vadd.f32 0.0, %v310
        %v312 = vpop.f32.mrf.mxu0
        %v313 = vpop.f32.mrf.mxu0
        %v314 = vadd.f32 0.0, %v313
        %v315 = vpop.f32.mrf.mxu0
        %316 = vdwg.mxu0
        %v319 = vunpack.c.l.b16 %v252
        %v320 = vunpack.c.l.b16 %v253
        %v321 = vpack.c.b16 %v320, %v319
        %v323 = vsel %vm272, %v321, 0
        %325 = vmatprep.subr.bf16.mxu0 0
        %326 = vmatpush1.bf16.msra.mxu0 0
        %327 = vmatprep.subr.bf16.mxu0 0
        %328 = vmatpush1.bf16.msra.mxu0 0
        %329 = vmatprep.subr.bf16.mxu0 0
        %330 = vmatpush1.bf16.msra.mxu0 0
        %331 = vmatprep.subr.bf16.mxu0 0
        %332 = vmatpush1.bf16.msra.mxu0 0
        %333 = vmatprep.subr.bf16.mxu0 0
        %334 = vmatpush1.bf16.msra.mxu0 0
        %335 = vmatprep.subr.bf16.mxu0 0
        %336 = vmatpush1.bf16.msra.mxu0 0
        %337 = vmatprep.subr.bf16.mxu0 0
        %338 = vmatpush1.bf16.msra.mxu0 0
        %339 = vmatprep.subr.bf16.mxu0 0
        %340 = vmatpush1.bf16.msra.mxu0 %v251
        %341 = vmatprep.subr.bf16.mxu0 0
        %342 = vmatpush2.bf16.msra.mxu0 0
        %343 = vmatprep.subr.bf16.mxu0 0
        %344 = vmatpush2.bf16.msra.mxu0 0
        %345 = vmatprep.subr.bf16.mxu0 0
        %346 = vmatpush2.bf16.msra.mxu0 0
        %347 = vmatprep.subr.bf16.mxu0 0
        %348 = vmatpush2.bf16.msra.mxu0 0
        %349 = vmatprep.subr.bf16.mxu0 0
        %350 = vmatpush2.bf16.msra.mxu0 0
        %351 = vmatprep.subr.bf16.mxu0 0
        %352 = vmatpush2.bf16.msra.mxu0 0
        %353 = vmatprep.subr.bf16.mxu0 0
        %354 = vmatpush2.bf16.msra.mxu0 0
        %355 = vmatprep.subr.bf16.mxu0 0
        %356 = vmatpush2.bf16.msra.mxu0 0
        %357 = vmatprep.mubr.bf16.mxu0 0
        %358 = vmatmul.mubr.bf16.gmra.mxu0 %v323
        %v359 = vpop.f32.mrf.mxu0
        %v360 = vadd.f32 %v311, %v359
        %v361 = vpop.f32.mrf.mxu0
        %v362 = vpop.f32.mrf.mxu0
        %v363 = vadd.f32 %v314, %v362
        %v364 = vpop.f32.mrf.mxu0
        %365 = vdwg.mxu0
        %v366 = vld [vmem:[%s1] sm:$0xff]
        %v367 = vld [vmem:[%s1 + $0x8] sm:$0xff]
        %369 = vset.pattern.permute.xlu0 0
        %370 = vperm.xlu0 %369, %v366
        %v371 = vpop.permute.xlu0 %370
        %374 = vset.pattern.permute.xlu0 0
        %375 = vperm.xlu0 %374, %v367
        %v376 = vpop.permute.xlu0 %375
        %v378 = vadd.f32 %v360, %v371
        %v379 = vadd.f32 %v363, %v376
        %v380 = vmax.f32 %v378, 0.0
        %v381 = vmax.f32 %v379, 0.0
        %v382 = vadd.f32 %v227, %v380
        %v383 = vadd.f32 %v228, %v381
        %v384 = vmax.f32 %v382, 0.0
        %v385 = vmax.f32 %v383, 0.0
        %386 = vst [vmem:[%s225] sm:$0xff] %v384
        %387 = vst [vmem:[%s225 + $0x8] sm:$0xff] %v385
        %s388 = sand.u32 %s109, 1
        %s389 = scalar_lea.sflag [#allocation5], %s388
        %s390 = sand.u32 %s109, 1
        %s391 = smul.addr %s390, 16
        %s392 = scalar_lea.vmem [#allocation4], %s391
        // Predicated region
        $region75: #{_lambda_.3} parent=65 // pred_check
          %p393 = pneg %p119
        $region76: #{_lambda_.3} parent=65 // pred_check_branch
          %395 = sbr.rel (%p393) target = $region78
        $region77: #{_lambda_.3} parent=65 // pred_region
          %s397 = ssub.s32 256, 256
          %398 = vsyncadd %s389, %s397
          %s399 = smul.addr %s21, 4
          %s400 = sadd.s32 %s22, %s399
          %s401 = smul.addr %s400, 128
          %s402 = scalar_lea.hbm %s3, %s401
          %s403 = sshll.u32 %s392, 4
          %s404 = int_to_ptr.vmem [resolvable:$true] %s403
          %409 = dma.vmem_to_hbm [thread:$0]  %s404, 256, %s402, %s389, 128, 256, 8
        $region78: #{_lambda_.3} parent=65 // pred_fallthru
          _
      $region66: #{_lambda_.3} parent=5 // pred_fallthru
        _
      %p410 = scmp.le.s32.totalorder 2, %s12
      // Predicated region
      $region79: #{_lambda_.3} parent=5 // pred_check
        %p411 = pneg %p410
      $region80: #{_lambda_.3} parent=5 // pred_check_branch
        %413 = sbr.rel (%p411) target = $region82
      $region81: #{_lambda_.3} parent=5 // pred_region
        %s414 = ssub.s32 %s12, 2
        // Predicated region
        $region83: #{_lambda_.3} parent=81 // pred_check
          %p415 = pneg %p125
        $region84: #{_lambda_.3} parent=81 // pred_check_branch
          %417 = sbr.rel (%p415) target = $region86
        $region85: #{_lambda_.3} parent=81 // pred_region
          %s418 = sand.u32 %s110, 1
          %s419 = scalar_lea.sflag [#allocation5], %s418
          %s420 = sand.u32 %s110, 1
          %s421 = smul.addr %s420, 16
          %s422 = scalar_lea.vmem [#allocation4], %s421
          %423 = dma.done %s419, 256
        $region86: #{_lambda_.3} parent=81 // pred_fallthru
          _
      $region82: #{_lambda_.3} parent=5 // pred_fallthru
        _
    $region6: #{_lambda_.3} parent=1 // loop_footer
      %s16 = sadd.s32 1, %s12
    $region7: #{_lambda_.3} parent=1 // loop_footer_branch
      %11 = sbr.rel target = $region3
    $region8: #{_lambda_.3} parent=1 // loop_exit
      _
    %424 = vsyncpa [#allocation5], 1
    %s425 = scalar_lea.sflag [#allocation5], 1
    %426 = vsyncpa %s425, 1

</llo_original>
